<compile_context>
chip_gen: v7x
topology: tpu7x:2x2x1
jax: 0.10.0
libtpu: 0.0.40
codegen_flags: <defaults>
</compile_context>

<pallas_src>
import functools

import jax
import jax.numpy as jnp
from jax import lax
from jax.experimental import pallas as pl
from jax.experimental.pallas import tpu as pltpu

EPS = 1e-12  # F.normalize default eps


def _round_up(x, m):
    return (x + m - 1) // m * m


def _l2_normalize_rows(y):
    # y / max(||y||, EPS)  ==  y * rsqrt(max(sum(y^2), EPS^2))
    ss = jnp.sum(y * y, axis=1, keepdims=True)
    return y * lax.rsqrt(jnp.maximum(ss, EPS * EPS))


def _linear_kernel(x_ref, w_ref, b_ref, o_ref, *, mxu_dtype):
    # y = x @ W^T + b (f32 accumulation), then row-wise L2 normalization.
    x = x_ref[...].astype(mxu_dtype)          # cast in-kernel (no HBM prepass)
    y = jnp.dot(x, w_ref[...], preferred_element_type=jnp.float32)
    y = y + b_ref[...]
    o_ref[...] = _l2_normalize_rows(y).astype(o_ref.dtype)


def _mlp_kernel(x_ref, w1_ref, b1_ref, w2_ref, b2_ref, o_ref, *, mxu_dtype):
    # h = relu(x @ W1^T + b1);  y = h @ W2^T + b2;  normalize rows.
    x = x_ref[...].astype(mxu_dtype)
    h = jnp.dot(x, w1_ref[...], preferred_element_type=jnp.float32)
    h = jnp.maximum(h + b1_ref[...], 0.0)
    y = jnp.dot(h.astype(w2_ref.dtype), w2_ref[...],
                preferred_element_type=jnp.float32)
    y = y + b2_ref[...]
    o_ref[...] = _l2_normalize_rows(y).astype(o_ref.dtype)


def _vmem_capacity_bytes():
    try:
        return int(pltpu.get_tpu_info().vmem_capacity_bytes)
    except Exception:
        return 64 << 20  # conservative fallback: v7x has 64 MiB per TensorCore


def _default_row_tile():
    try:
        kind = jax.devices()[0].device_kind.lower()
    except Exception:
        kind = ""
    # v5e: 1 vst slot / 16 MiB default scoped VMEM -> smaller row tile already
    # reaches the HBM roofline with far less VMEM pressure.
    if "v5 lite" in kind or "v5e" in kind or "v5lite" in kind:
        return 256
    return 512


def _vmem_limit(resident_bytes, stream_bytes, scratch_bytes):
    # single-buffered residents + double-buffered x/out streams + in-kernel
    # temporaries + headroom, clamped to ~90% of this chip's physical VMEM.
    need = resident_bytes + 2 * stream_bytes + scratch_bytes + (2 << 20)
    cap = (9 * _vmem_capacity_bytes()) // 10
    return int(min(max(need, 16 << 20), cap))


def _run_head(kernel, inputs, *, grid, x_spec, resident_shapes, out_spec,
              out_shape, vmem_bytes, cost):
    """Builds and runs the pallas_call; residents are single-buffered."""

    def build(single_buffer_weights):
        res_specs = []
        for shp in resident_shapes:
            if single_buffer_weights:
                # Constant block across the grid -> DMA'd once; single buffer
                # halves the resident-weight VMEM footprint.
                res_specs.append(pl.BlockSpec(shp, lambda i: (0, 0),
                                              pipeline_mode=pl.Buffered(1)))
            else:
                res_specs.append(pl.BlockSpec(shp, lambda i: (0, 0)))
        return pl.pallas_call(
            kernel,
            out_shape=out_shape,
            grid=grid,
            in_specs=[x_spec] + res_specs,
            out_specs=out_spec,
            compiler_params=pltpu.CompilerParams(
                dimension_semantics=("parallel",),
                vmem_limit_bytes=vmem_bytes,
                # Let XLA fuse the (same-dtype) zero pad of X into the input
                # DMA instead of materializing a padded copy in HBM.
                allow_input_fusion=[True] + [False] * len(resident_shapes)),
            cost_estimate=cost,
        )

    try:
        return build(True)(*inputs)
    except Exception:
        # Fallback if pl.Buffered(1) resident blocks are rejected by this
        # JAX/Mosaic build; any unrelated error re-surfaces on this path too.
        return build(False)(*inputs)


def projection_head(x, params, head="linear", *, mxu_dtype=jnp.bfloat16,
                    tm=None, out_dtype=None):
    """Pallas implementation of Projection_head.forward.

    x: (N, dim_in) float32
    params:
      head='linear' -> (W (feat_dim, dim_in), b (feat_dim,))
      head='mlp'    -> (W1 (dim_in, dim_in), b1 (dim_in,),
                        W2 (feat_dim, dim_in), b2 (feat_dim,))
    out_dtype: optional output dtype (e.g. jnp.bfloat16 to halve write traffic);
               defaults to x.dtype.
    returns: (N, feat_dim) with L2-normalized rows.
    """
    n, dim_in = x.shape
    out_dtype = x.dtype if out_dtype is None else jnp.dtype(out_dtype)
    mxu_itemsize = jnp.dtype(mxu_dtype).itemsize
    x_itemsize = jnp.dtype(x.dtype).itemsize
    out_itemsize = jnp.dtype(out_dtype).itemsize

    # Lane-dense padding on feature axes (multiples of 128).
    dim_in_p = _round_up(dim_in, 128)

    # Balanced row tile: minimal batch padding for the per-chip max tile, and
    # >= 2 grid steps when possible so both v7x TensorCores get work.
    tm_max = tm if tm is not None else _default_row_tile()
    steps = pl.cdiv(n, tm_max)
    tm_eff = _round_up(pl.cdiv(n, steps), 8)
    if steps < 2 and tm_eff > 8:
        tm_eff = _round_up(pl.cdiv(tm_eff, 2), 8)
        steps = pl.cdiv(n, tm_eff)
    n_p = steps * tm_eff
    grid = (steps,)

    # X stays in its original dtype (MXU cast happens inside the kernel);
    # only a fusible zero pad is applied when shapes require it.
    if (n_p, dim_in_p) != (n, dim_in):
        x_p = jnp.pad(x, ((0, n_p - n), (0, dim_in_p - dim_in)))
    else:
        x_p = x

    def pad_w(w):
        # (out, in) -> transposed to (in, out), zero-padded, cast to MXU dtype.
        o, i = w.shape
        return jnp.pad(w.T.astype(mxu_dtype),
                       ((0, dim_in_p - i), (0, _round_up(o, 128) - o)))

    def pad_b(b):
        o = b.shape[0]
        return jnp.pad(b.astype(jnp.float32),
                       (0, _round_up(o, 128) - o)).reshape(1, -1)

    x_spec = pl.BlockSpec((tm_eff, dim_in_p), lambda i: (i, 0))

    if head == "linear":
        w, b = params
        feat_dim = w.shape[0]
        feat_p = _round_up(feat_dim, 128)
        w_p, b_p = pad_w(w), pad_b(b)

        resident = w_p.size * mxu_itemsize + b_p.size * 4
        stream = tm_eff * (dim_in_p * x_itemsize + feat_p * out_itemsize)
        scratch = tm_eff * (dim_in_p * mxu_itemsize + 2 * feat_p * 4)
        cost = pl.CostEstimate(
            flops=2 * n_p * dim_in_p * feat_p,
            transcendentals=n_p,
            bytes_accessed=int(n_p * dim_in_p * x_itemsize + resident
                               + n_p * feat_p * out_itemsize))

        out = _run_head(
            functools.partial(_linear_kernel, mxu_dtype=mxu_dtype),
            (x_p, w_p, b_p),
            grid=grid, x_spec=x_spec,
            resident_shapes=[(dim_in_p, feat_p), (1, feat_p)],
            out_spec=pl.BlockSpec((tm_eff, feat_p), lambda i: (i, 0)),
            out_shape=jax.ShapeDtypeStruct((n_p, feat_p), out_dtype),
            vmem_bytes=_vmem_limit(resident, stream, scratch),
            cost=cost)
        return out[:n, :feat_dim]

    elif head == "mlp":
        w1, b1, w2, b2 = params
        feat_dim = w2.shape[0]
        feat_p = _round_up(feat_dim, 128)
        w1_p, b1_p = pad_w(w1), pad_b(b1)
        w2_p, b2_p = pad_w(w2), pad_b(b2)
        # TODO(synk): for dim_in >~ 4K on v7x (64 MiB VMEM/TC), stream W1 over
        # an extra "arbitrary" K grid axis with an f32 accumulator instead of
        # keeping the full W1 resident.

        resident = ((w1_p.size + w2_p.size) * mxu_itemsize
                    + (b1_p.size + b2_p.size) * 4)
        stream = tm_eff * (dim_in_p * x_itemsize + feat_p * out_itemsize)
        scratch = tm_eff * (dim_in_p * (2 * mxu_itemsize + 4) + feat_p * 4)
        cost = pl.CostEstimate(
            flops=2 * n_p * dim_in_p * (dim_in_p + feat_p),
            transcendentals=n_p,
            bytes_accessed=int(n_p * dim_in_p * x_itemsize + resident
                               + n_p * feat_p * out_itemsize))

        out = _run_head(
            functools.partial(_mlp_kernel, mxu_dtype=mxu_dtype),
            (x_p, w1_p, b1_p, w2_p, b2_p),
            grid=grid, x_spec=x_spec,
            resident_shapes=[(dim_in_p, dim_in_p), (1, dim_in_p),
                             (dim_in_p, feat_p), (1, feat_p)],
            out_spec=pl.BlockSpec((tm_eff, feat_p), lambda i: (i, 0)),
            out_shape=jax.ShapeDtypeStruct((n_p, feat_p), out_dtype),
            vmem_bytes=_vmem_limit(resident, stream, scratch),
            cost=cost)
        return out[:n, :feat_dim]

    raise ValueError(f"unknown head: {head}")


def _init_linear(key, out_dim, in_dim):
    # Deterministic init mirroring nn.Linear's U(-1/sqrt(fan_in), 1/sqrt(fan_in)).
    kw, kb = jax.random.split(key)
    bound = 1.0 / jnp.sqrt(jnp.float32(in_dim))
    w = jax.random.uniform(kw, (out_dim, in_dim), jnp.float32, -bound, bound)
    b = jax.random.uniform(kb, (out_dim,), jnp.float32, -bound, bound)
    return w, b


def _reference(x, params, head):
    # plain-JAX f32 reference (mirrors PyTorch semantics).
    if head == "linear":
        w, b = params
        y = x @ w.T + b
    else:
        w1, b1, w2, b2 = params
        y = jnp.maximum(x @ w1.T + b1, 0.0) @ w2.T + b2
    norm = jnp.maximum(jnp.linalg.norm(y, axis=1, keepdims=True), EPS)
    return y / norm


if __name__ == "__main__":
    batch, dim_in, feat_dim = 8, 32, 16
    key = jax.random.PRNGKey(0)
    kx, k1, k2, k3, kx2 = jax.random.split(key, 5)

    x = jax.random.normal(kx, (batch, dim_in), jnp.float32)

    lin_params = _init_linear(k1, feat_dim, dim_in)
    w1, b1 = _init_linear(k2, dim_in, dim_in)
    w2, b2 = _init_linear(k3, feat_dim, dim_in)
    mlp_params = (w1, b1, w2, b2)

    # Exact-semantics check: f32 MXU operands, tight tolerance.
    out_lin_f32 = jax.block_until_ready(
        projection_head(x, lin_params, head="linear", mxu_dtype=jnp.float32))
    assert jnp.allclose(out_lin_f32, _reference(x, lin_params, "linear"),
                        atol=1e-5, rtol=1e-5)

    # Default fast path: bf16 MXU operands, f32 accumulation / epilogue.
    out_lin = jax.block_until_ready(projection_head(x, lin_params, head="linear"))
    assert jnp.allclose(out_lin, _reference(x, lin_params, "linear"),
                        atol=3e-2, rtol=3e-2)

    out_mlp = jax.block_until_ready(projection_head(x, mlp_params, head="mlp"))
    assert jnp.allclose(out_mlp, _reference(x, mlp_params, "mlp"),
                        atol=3e-2, rtol=3e-2)

    # Optional bf16 output (halves output HBM traffic for the DMA-bound head).
    out_lin_bf16 = jax.block_until_ready(
        projection_head(x, lin_params, head="linear", out_dtype=jnp.bfloat16))
    assert out_lin_bf16.dtype == jnp.bfloat16
    assert jnp.allclose(out_lin_bf16.astype(jnp.float32),
                        _reference(x, lin_params, "linear"),
                        atol=5e-2, rtol=5e-2)

    # Ragged batch / feature sizes exercise padding + the 2-step grid path.
    x2 = jax.random.normal(kx2, (13, 40), jnp.float32)
    lin2 = _init_linear(k1, 24, 40)
    out2 = jax.block_until_ready(projection_head(x2, lin2, head="linear"))
    assert out2.shape == (13, 24)
    assert jnp.allclose(out2, _reference(x2, lin2, "linear"),
                        atol=3e-2, rtol=3e-2)

    print("KERNEL_OK")
</pallas_src>

<mosaic_0001>
module attributes {stable_mosaic.version = 11 : i64} {
  func.func @_linear_kernel(%arg0: i32, %arg1: memref<8x128xf32, #tpu.memory_space<vmem>>, %arg2: memref<128x128xf32, #tpu.memory_space<vmem>>, %arg3: memref<1x128xf32, #tpu.memory_space<vmem>>, %arg4: memref<8x128xf32, #tpu.memory_space<vmem>>) attributes {dimension_semantics = [#tpu.dimension_semantics<parallel>], iteration_bounds = array<i64: 1>, scalar_prefetch = 0 : i64, scratch_operands = 0 : i64, tpu.core_type = #tpu.core_type<tc>, window_params = [{transform_indices = @transform_0, window_bounds = array<i64: 8, 128>}, {pipeline_mode = #tpu.pipeline_mode<synchronous>, transform_indices = @transform_1, window_bounds = array<i64: 128, 128>}, {pipeline_mode = #tpu.pipeline_mode<synchronous>, transform_indices = @transform_2, window_bounds = array<i64: 1, 128>}, {transform_indices = @transform_3, window_bounds = array<i64: 8, 128>}]} {
    %c0 = arith.constant 0 : index
    %c0_0 = arith.constant 0 : index
    %0 = vector.load %arg1[%c0, %c0_0] : memref<8x128xf32, #tpu.memory_space<vmem>>, vector<8x128xf32>
    %c0_1 = arith.constant 0 : index
    %c0_2 = arith.constant 0 : index
    %1 = vector.load %arg2[%c0_1, %c0_2] : memref<128x128xf32, #tpu.memory_space<vmem>>, vector<128x128xf32>
    %cst = arith.constant dense<0.000000e+00> : vector<8x128xf32>
    %2 = tpu.matmul %0, %1, %cst {dimension_numbers = #tpu.dot_dimension_numbers<[1], [0], [0], [1], [0, 0, 1, 1], [], []>} : vector<8x128xf32>, vector<128x128xf32>, vector<8x128xf32> -> vector<8x128xf32>
    %c0_3 = arith.constant 0 : index
    %c0_4 = arith.constant 0 : index
    %3 = vector.load %arg3[%c0_3, %c0_4] : memref<1x128xf32, #tpu.memory_space<vmem>>, vector<1x128xf32>
    %4 = vector.broadcast %3 : vector<1x128xf32> to vector<8x128xf32>
    %5 = arith.addf %2, %4 : vector<8x128xf32>
    %6 = arith.mulf %5, %5 : vector<8x128xf32>
    %cst_5 = arith.constant dense<0.000000e+00> : vector<8xf32>
    %7 = vector.multi_reduction <add>, %6, %cst_5 [1] : vector<8x128xf32> to vector<8xf32>
    %8 = vector.shape_cast %7 : vector<8xf32> to vector<8x1xf32>
    %cst_6 = arith.constant 1.000000e-24 : f32
    %9 = vector.broadcast %cst_6 : f32 to vector<8x1xf32>
    %10 = arith.maximumf %8, %9 : vector<8x1xf32>
    %11 = math.rsqrt %10 : vector<8x1xf32>
    %12 = vector.broadcast %11 : vector<8x1xf32> to vector<8x128xf32>
    %13 = arith.mulf %5, %12 : vector<8x128xf32>
    %c0_7 = arith.constant 0 : index
    %c0_8 = arith.constant 0 : index
    %14 = vector.load %arg4[%c0_7, %c0_8] : memref<8x128xf32, #tpu.memory_space<vmem>>, vector<8x128xf32>
    tpu.vector_store %arg4[%c0_7, %c0_8], %13 {strides = array<i32>} : memref<8x128xf32, #tpu.memory_space<vmem>>, vector<8x128xf32>,
    return
  }
  func.func @transform_0(%arg0: i32) -> (i32, i32) {
    %c0_i32 = arith.constant 0 : i32
    %c0_i32_0 = arith.constant 0 : i32
    return %arg0, %c0_i32 : i32, i32
  }
  func.func @transform_1(%arg0: i32) -> (i32, i32) {
    %c0_i32 = arith.constant 0 : i32
    %c0_i32_0 = arith.constant 0 : i32
    %c0_i32_1 = arith.constant 0 : i32
    return %c0_i32, %c0_i32_0 : i32, i32
  }
  func.func @transform_2(%arg0: i32) -> (i32, i32) {
    %c0_i32 = arith.constant 0 : i32
    %c0_i32_0 = arith.constant 0 : i32
    %c0_i32_1 = arith.constant 0 : i32
    return %c0_i32, %c0_i32_0 : i32, i32
  }
  func.func @transform_3(%arg0: i32) -> (i32, i32) {
    %c0_i32 = arith.constant 0 : i32
    %c0_i32_0 = arith.constant 0 : i32
    return %arg0, %c0_i32 : i32, i32
  }
}

module attributes {stable_mosaic.version = 11 : i64} {
  func.func @_linear_kernel(%arg0: i32, %arg1: memref<8x128xf32, #tpu.memory_space<vmem>>, %arg2: memref<128x128xf32, #tpu.memory_space<vmem>>, %arg3: memref<1x128xf32, #tpu.memory_space<vmem>>, %arg4: memref<8x128xf32, #tpu.memory_space<vmem>>) attributes {dimension_semantics = [#tpu.dimension_semantics<parallel>], iteration_bounds = array<i64: 1>, scalar_prefetch = 0 : i64, scratch_operands = 0 : i64, tpu.core_type = #tpu.core_type<tc>, window_params = [{transform_indices = @transform_0, window_bounds = array<i64: 8, 128>}, {pipeline_mode = #tpu.pipeline_mode<synchronous>, transform_indices = @transform_1, window_bounds = array<i64: 128, 128>}, {pipeline_mode = #tpu.pipeline_mode<synchronous>, transform_indices = @transform_2, window_bounds = array<i64: 1, 128>}, {transform_indices = @transform_3, window_bounds = array<i64: 8, 128>}]} {
    %c0 = arith.constant 0 : index
    %c0_0 = arith.constant 0 : index
    %0 = vector.load %arg1[%c0, %c0_0] : memref<8x128xf32, #tpu.memory_space<vmem>>, vector<8x128xf32>
    %c0_1 = arith.constant 0 : index
    %c0_2 = arith.constant 0 : index
    %1 = vector.load %arg2[%c0_1, %c0_2] : memref<128x128xf32, #tpu.memory_space<vmem>>, vector<128x128xf32>
    %cst = arith.constant dense<0.000000e+00> : vector<8x128xf32>
    %2 = tpu.matmul %0, %1, %cst {dimension_numbers = #tpu.dot_dimension_numbers<[1], [0], [0], [1], [0, 0, 1, 1], [], []>} : vector<8x128xf32>, vector<128x128xf32>, vector<8x128xf32> -> vector<8x128xf32>
    %c0_3 = arith.constant 0 : index
    %c0_4 = arith.constant 0 : index
    %3 = vector.load %arg3[%c0_3, %c0_4] : memref<1x128xf32, #tpu.memory_space<vmem>>, vector<1x128xf32>
    %4 = vector.broadcast %3 : vector<1x128xf32> to vector<8x128xf32>
    %5 = arith.addf %2, %4 : vector<8x128xf32>
    %6 = arith.mulf %5, %5 : vector<8x128xf32>
    %cst_5 = arith.constant dense<0.000000e+00> : vector<8xf32>
    %7 = vector.multi_reduction <add>, %6, %cst_5 [1] : vector<8x128xf32> to vector<8xf32>
    %8 = vector.shape_cast %7 : vector<8xf32> to vector<8x1xf32>
    %cst_6 = arith.constant 1.000000e-24 : f32
    %9 = vector.broadcast %cst_6 : f32 to vector<8x1xf32>
    %10 = arith.maximumf %8, %9 : vector<8x1xf32>
    %11 = math.rsqrt %10 : vector<8x1xf32>
    %12 = vector.broadcast %11 : vector<8x1xf32> to vector<8x128xf32>
    %13 = arith.mulf %5, %12 : vector<8x128xf32>
    %c0_7 = arith.constant 0 : index
    %c0_8 = arith.constant 0 : index
    %14 = vector.load %arg4[%c0_7, %c0_8] : memref<8x128xf32, #tpu.memory_space<vmem>>, vector<8x128xf32>
    tpu.vector_store %arg4[%c0_7, %c0_8], %13 {strides = array<i32>} : memref<8x128xf32, #tpu.memory_space<vmem>>, vector<8x128xf32>,
    return
  }
  func.func @transform_0(%arg0: i32) -> (i32, i32) {
    %c0_i32 = arith.constant 0 : i32
    %c0_i32_0 = arith.constant 0 : i32
    return %arg0, %c0_i32 : i32, i32
  }
  func.func @transform_1(%arg0: i32) -> (i32, i32) {
    %c0_i32 = arith.constant 0 : i32
    %c0_i32_0 = arith.constant 0 : i32
    %c0_i32_1 = arith.constant 0 : i32
    return %c0_i32, %c0_i32_0 : i32, i32
  }
  func.func @transform_2(%arg0: i32) -> (i32, i32) {
    %c0_i32 = arith.constant 0 : i32
    %c0_i32_0 = arith.constant 0 : i32
    %c0_i32_1 = arith.constant 0 : i32
    return %c0_i32, %c0_i32_0 : i32, i32
  }
  func.func @transform_3(%arg0: i32) -> (i32, i32) {
    %c0_i32 = arith.constant 0 : i32
    %c0_i32_0 = arith.constant 0 : i32
    return %arg0, %c0_i32 : i32, i32
  }
}

</mosaic_0001>

<llo_original>
// kernel: tpu_custom_call.1
$region0: #{tpu_custom_call.1}
  #allocation0 [shape = 'u32[]', space=smem, size = 0x4, offset = 0x4, fixed_abs, tag = 'smem constant byte address 0x4 - core index']
  #allocation1 [shape = 'u32[144,128]{1,0:T(1,128)}', space=vmem, size = 0x12000, scoped, tag = 'internal scratch']
  %s0 = inlined_call_operand.hbm [shape: f32[8,128], index: 0, kind: input, shape index: {}]
  %s1 = inlined_call_operand.hbm [shape: f32[128,128], index: 1, kind: input, shape index: {}]
  %s2 = inlined_call_operand.vmem [shape: f32[1,128], index: 2, kind: input, shape index: {}]
  %s3 = inlined_call_operand.hbm [shape: f32[8,128], index: 3, kind: output, shape index: {}]
  %s4 = sld [smem:[#allocation0]]
  $region30: #{tpu_custom_call.1} parent=0
    _
  %s6 = ssub.s32 1, %s4
  %s7 = scalar_select 0, %s6, %s4
  $region1: #{tpu_custom_call.1} parent=0
    #allocation2 [shape = 'u8[4096]{0}', space=vmem, size = 0x1000, scoped, tag = 'input window, operand 0, single buffered']
    #allocation3 [shape = 's32[1]{0}', space=sflag, size = 0x4, scoped, tag = 'scoped memory for tpu_custom_call.1']
    #allocation4 [shape = 's32[1]{0}', space=sflag, size = 0x4, scoped, tag = 'scoped memory for tpu_custom_call.1']
    #allocation5 [shape = 'u8[65536]{0}', space=vmem, size = 0x10000, scoped, tag = 'input window, operand 1, single buffered']
    #allocation6 [shape = 's32[1]{0}', space=sflag, size = 0x4, scoped, tag = 'scoped memory for tpu_custom_call.1']
    #allocation7 [shape = 'u8[4096]{0}', space=vmem, size = 0x1000, scoped, tag = 'output window, operand 0, single buffered']
    %8 = vsyncpa [#allocation3], 0
    %9 = vsyncpa [#allocation6], 0
    %10 = vsyncpa [#allocation4], 0
    // Predicated region
    $region2: #{tpu_custom_call.1} parent=1 // pred_check
      _
    $region3: #{tpu_custom_call.1} parent=1 // pred_check_branch
      %12 = sbr.rel (0) target = $region5
    $region4: #{tpu_custom_call.1} parent=1 // pred_region
      %s14 = ssub.s32 128, 128
      %15 = vsyncadd [#allocation3], %s14
      %s17 = sshll.u32 [#allocation2], 4
      %s18 = int_to_ptr.vmem [resolvable:$true] %s17
      %20 = dma.hbm_to_vmem [thread:$0]  %s0, 128, %s18, [#allocation3]
    $region5: #{tpu_custom_call.1} parent=1 // pred_fallthru
      _
    // Predicated region
    $region6: #{tpu_custom_call.1} parent=1 // pred_check
      _
    $region7: #{tpu_custom_call.1} parent=1 // pred_check_branch
      %22 = sbr.rel (0) target = $region9
    $region8: #{tpu_custom_call.1} parent=1 // pred_region
      %s24 = ssub.s32 2048, 2048
      %25 = vsyncadd [#allocation6], %s24
      %s26 = sshll.u32 [#allocation5], 4
      %s27 = int_to_ptr.vmem [resolvable:$true] %s26
      %32 = dma.hbm_to_vmem [thread:$0]  %s1, 2048, %s27, [#allocation6], 128, 128, 8
    $region9: #{tpu_custom_call.1} parent=1 // pred_fallthru
      _
    // Predicated region
    $region10: #{tpu_custom_call.1} parent=1 // pred_check
      _
    $region11: #{tpu_custom_call.1} parent=1 // pred_check_branch
      %34 = sbr.rel (0) target = $region13
    $region12: #{tpu_custom_call.1} parent=1 // pred_region
      _
    $region13: #{tpu_custom_call.1} parent=1 // pred_fallthru
      _
    // Predicated region
    $region14: #{tpu_custom_call.1} parent=1 // pred_check
      _
    $region15: #{tpu_custom_call.1} parent=1 // pred_check_branch
      %36 = sbr.rel (0) target = $region17
    $region16: #{tpu_custom_call.1} parent=1 // pred_region
      %37 = dma.done [#allocation3], 128
    $region17: #{tpu_custom_call.1} parent=1 // pred_fallthru
      _
    // Predicated region
    $region18: #{tpu_custom_call.1} parent=1 // pred_check
      _
    $region19: #{tpu_custom_call.1} parent=1 // pred_check_branch
      %39 = sbr.rel (0) target = $region21
    $region20: #{tpu_custom_call.1} parent=1 // pred_region
      %40 = dma.done [#allocation6], 2048
    $region21: #{tpu_custom_call.1} parent=1 // pred_fallthru
      _
    %v41 = vld [vmem:[#allocation2] sm:$0xff]
    %v42 = vld [vmem:[#allocation5] sm:$0xff]
    %v43 = vld [vmem:[#allocation5 + $0x8] sm:$0xff]
    %v44 = vld [vmem:[#allocation5 + $0x10] sm:$0xff]
    %v45 = vld [vmem:[#allocation5 + $0x18] sm:$0xff]
    %v46 = vld [vmem:[#allocation5 + $0x20] sm:$0xff]
    %v47 = vld [vmem:[#allocation5 + $0x28] sm:$0xff]
    %v48 = vld [vmem:[#allocation5 + $0x30] sm:$0xff]
    %v49 = vld [vmem:[#allocation5 + $0x38] sm:$0xff]
    %v50 = vld [vmem:[#allocation5 + $0x40] sm:$0xff]
    %v51 = vld [vmem:[#allocation5 + $0x48] sm:$0xff]
    %v52 = vld [vmem:[#allocation5 + $0x50] sm:$0xff]
    %v53 = vld [vmem:[#allocation5 + $0x58] sm:$0xff]
    %v54 = vld [vmem:[#allocation5 + $0x60] sm:$0xff]
    %v55 = vld [vmem:[#allocation5 + $0x68] sm:$0xff]
    %v56 = vld [vmem:[#allocation5 + $0x70] sm:$0xff]
    %v57 = vld [vmem:[#allocation5 + $0x78] sm:$0xff]
    %v58 = vld [vmem:[%s2] sm:$0x1]
    %v60 = vlaneseq
    %v61 = vshrl.u32 %v60, 7
    %v62 = vsub.s32 0, %v61
    %v63 = vrot.slane %v58, %v62
    %65 = vmatprep.subr.mxu0 0.0
    %66 = vmatpush1.msra.mxu0 %v42
    %67 = vmatprep.subr.mxu0 0.0
    %68 = vmatpush1.msra.mxu0 %v43
    %69 = vmatprep.subr.mxu0 0.0
    %70 = vmatpush1.msra.mxu0 %v44
    %71 = vmatprep.subr.mxu0 0.0
    %72 = vmatpush1.msra.mxu0 %v45
    %73 = vmatprep.subr.mxu0 0.0
    %74 = vmatpush1.msra.mxu0 %v46
    %75 = vmatprep.subr.mxu0 0.0
    %76 = vmatpush1.msra.mxu0 %v47
    %77 = vmatprep.subr.mxu0 0.0
    %78 = vmatpush1.msra.mxu0 %v48
    %79 = vmatprep.subr.mxu0 0.0
    %80 = vmatpush1.msra.mxu0 %v49
    %81 = vmatprep.subr.mxu0 0.0
    %82 = vmatpush1.msra.mxu0 %v50
    %83 = vmatprep.subr.mxu0 0.0
    %84 = vmatpush1.msra.mxu0 %v51
    %85 = vmatprep.subr.mxu0 0.0
    %86 = vmatpush1.msra.mxu0 %v52
    %87 = vmatprep.subr.mxu0 0.0
    %88 = vmatpush1.msra.mxu0 %v53
    %89 = vmatprep.subr.mxu0 0.0
    %90 = vmatpush1.msra.mxu0 %v54
    %91 = vmatprep.subr.mxu0 0.0
    %92 = vmatpush1.msra.mxu0 %v55
    %93 = vmatprep.subr.mxu0 0.0
    %94 = vmatpush1.msra.mxu0 %v56
    %95 = vmatprep.subr.mxu0 0.0
    %96 = vmatpush1.msra.mxu0 %v57
    %97 = vmatprep.subr.mxu0 0.0
    %98 = vmatpush1.msra.mxu0 0.0
    %99 = vmatprep.subr.mxu0 0.0
    %100 = vmatpush1.msra.mxu0 0.0
    %101 = vmatprep.subr.mxu0 0.0
    %102 = vmatpush1.msra.mxu0 0.0
    %103 = vmatprep.subr.mxu0 0.0
    %104 = vmatpush1.msra.mxu0 0.0
    %105 = vmatprep.subr.mxu0 0.0
    %106 = vmatpush1.msra.mxu0 0.0
    %107 = vmatprep.subr.mxu0 0.0
    %108 = vmatpush1.msra.mxu0 0.0
    %109 = vmatprep.subr.mxu0 0.0
    %110 = vmatpush1.msra.mxu0 0.0
    %111 = vmatprep.subr.mxu0 0.0
    %112 = vmatpush1.msra.mxu0 0.0
    %113 = vmatprep.subr.mxu0 0.0
    %114 = vmatpush1.msra.mxu0 0.0
    %115 = vmatprep.subr.mxu0 0.0
    %116 = vmatpush1.msra.mxu0 0.0
    %117 = vmatprep.subr.mxu0 0.0
    %118 = vmatpush1.msra.mxu0 0.0
    %119 = vmatprep.subr.mxu0 0.0
    %120 = vmatpush1.msra.mxu0 0.0
    %121 = vmatprep.subr.mxu0 0.0
    %122 = vmatpush1.msra.mxu0 0.0
    %123 = vmatprep.subr.mxu0 0.0
    %124 = vmatpush1.msra.mxu0 0.0
    %125 = vmatprep.subr.mxu0 0.0
    %126 = vmatpush1.msra.mxu0 0.0
    %127 = vmatprep.subr.mxu0 0.0
    %128 = vmatpush1.msra.mxu0 0.0
    %129 = vmatprep.mubr.f32.mxu0 0.0
    %130 = vmatmul.mubr.f32.gmra.mrb[0].mxu0 %v41
    %v131 = vpop.f32.mrb[0].mxu0
    %v132 = vadd.f32 %v63, %v131
    %v133 = vpop.f32.mrb[0].mxu0
    %134 = vdwg.mxu0
    %v135 = vmul.f32 %v132, %v132
    %136 = vadd.xlane.f32.xlu0 %v135
    %v137 = vpop.xlane.xlu0 %136
    %v138 = vmax.f32 %v137, 1e-24
    %v139 = vrsqrt.pop %v138
    %v140 = vmul.f32 %v132, %v139
    %141 = vst [vmem:[#allocation7] sm:$0xff] %v140
    // Predicated region
    $region22: #{tpu_custom_call.1} parent=1 // pred_check
      _
    $region23: #{tpu_custom_call.1} parent=1 // pred_check_branch
      %143 = sbr.rel (0) target = $region25
    $region24: #{tpu_custom_call.1} parent=1 // pred_region
      %s145 = ssub.s32 128, 128
      %146 = vsyncadd [#allocation4], %s145
      %s148 = sshll.u32 [#allocation7], 4
      %s149 = int_to_ptr.vmem [resolvable:$true] %s148
      %151 = dma.vmem_to_hbm [thread:$0]  %s149, 128, %s3, [#allocation4]
    $region25: #{tpu_custom_call.1} parent=1 // pred_fallthru
      _
    // Predicated region
    $region26: #{tpu_custom_call.1} parent=1 // pred_check
      _
    $region27: #{tpu_custom_call.1} parent=1 // pred_check_branch
      %153 = sbr.rel (0) target = $region29
    $region28: #{tpu_custom_call.1} parent=1 // pred_region
      %154 = dma.done [#allocation4], 128
    $region29: #{tpu_custom_call.1} parent=1 // pred_fallthru
      _
    %155 = vsyncpa [#allocation3], 1
    %156 = vsyncpa [#allocation6], 1
    %157 = vsyncpa [#allocation4], 1

// kernel: tpu_custom_call.1
$region0: #{tpu_custom_call.1}
  #allocation0 [shape = 'u32[]', space=smem, size = 0x4, offset = 0x4, fixed_abs, tag = 'smem constant byte address 0x4 - core index']
  #allocation1 [shape = 'u32[144,128]{1,0:T(1,128)}', space=vmem, size = 0x12000, scoped, tag = 'internal scratch']
  %s0 = inlined_call_operand.hbm [shape: f32[8,128], index: 0, kind: input, shape index: {}]
  %s1 = inlined_call_operand.hbm [shape: f32[128,128], index: 1, kind: input, shape index: {}]
  %s2 = inlined_call_operand.vmem [shape: f32[1,128], index: 2, kind: input, shape index: {}]
  %s3 = inlined_call_operand.hbm [shape: f32[8,128], index: 3, kind: output, shape index: {}]
  %s4 = sld [smem:[#allocation0]]
  $region30: #{tpu_custom_call.1} parent=0
    _
  %s6 = ssub.s32 1, %s4
  %s7 = scalar_select 0, %s6, %s4
  $region1: #{tpu_custom_call.1} parent=0
    #allocation2 [shape = 'u8[4096]{0}', space=vmem, size = 0x1000, scoped, tag = 'input window, operand 0, single buffered']
    #allocation3 [shape = 's32[1]{0}', space=sflag, size = 0x4, scoped, tag = 'scoped memory for tpu_custom_call.1']
    #allocation4 [shape = 's32[1]{0}', space=sflag, size = 0x4, scoped, tag = 'scoped memory for tpu_custom_call.1']
    #allocation5 [shape = 'u8[65536]{0}', space=vmem, size = 0x10000, scoped, tag = 'input window, operand 1, single buffered']
    #allocation6 [shape = 's32[1]{0}', space=sflag, size = 0x4, scoped, tag = 'scoped memory for tpu_custom_call.1']
    #allocation7 [shape = 'u8[4096]{0}', space=vmem, size = 0x1000, scoped, tag = 'output window, operand 0, single buffered']
    %8 = vsyncpa [#allocation3], 0
    %9 = vsyncpa [#allocation6], 0
    %10 = vsyncpa [#allocation4], 0
    // Predicated region
    $region2: #{tpu_custom_call.1} parent=1 // pred_check
      _
    $region3: #{tpu_custom_call.1} parent=1 // pred_check_branch
      %12 = sbr.rel (0) target = $region5
    $region4: #{tpu_custom_call.1} parent=1 // pred_region
      %s14 = ssub.s32 128, 128
      %15 = vsyncadd [#allocation3], %s14
      %s17 = sshll.u32 [#allocation2], 4
      %s18 = int_to_ptr.vmem [resolvable:$true] %s17
      %20 = dma.hbm_to_vmem [thread:$0]  %s0, 128, %s18, [#allocation3]
    $region5: #{tpu_custom_call.1} parent=1 // pred_fallthru
      _
    // Predicated region
    $region6: #{tpu_custom_call.1} parent=1 // pred_check
      _
    $region7: #{tpu_custom_call.1} parent=1 // pred_check_branch
      %22 = sbr.rel (0) target = $region9
    $region8: #{tpu_custom_call.1} parent=1 // pred_region
      %s24 = ssub.s32 2048, 2048
      %25 = vsyncadd [#allocation6], %s24
      %s26 = sshll.u32 [#allocation5], 4
      %s27 = int_to_ptr.vmem [resolvable:$true] %s26
      %32 = dma.hbm_to_vmem [thread:$0]  %s1, 2048, %s27, [#allocation6], 128, 128, 8
    $region9: #{tpu_custom_call.1} parent=1 // pred_fallthru
      _
    // Predicated region
    $region10: #{tpu_custom_call.1} parent=1 // pred_check
      _
    $region11: #{tpu_custom_call.1} parent=1 // pred_check_branch
      %34 = sbr.rel (0) target = $region13
    $region12: #{tpu_custom_call.1} parent=1 // pred_region
      _
    $region13: #{tpu_custom_call.1} parent=1 // pred_fallthru
      _
    // Predicated region
    $region14: #{tpu_custom_call.1} parent=1 // pred_check
      _
    $region15: #{tpu_custom_call.1} parent=1 // pred_check_branch
      %36 = sbr.rel (0) target = $region17
    $region16: #{tpu_custom_call.1} parent=1 // pred_region
      %37 = dma.done [#allocation3], 128
    $region17: #{tpu_custom_call.1} parent=1 // pred_fallthru
      _
    // Predicated region
    $region18: #{tpu_custom_call.1} parent=1 // pred_check
      _
    $region19: #{tpu_custom_call.1} parent=1 // pred_check_branch
      %39 = sbr.rel (0) target = $region21
    $region20: #{tpu_custom_call.1} parent=1 // pred_region
      %40 = dma.done [#allocation6], 2048
    $region21: #{tpu_custom_call.1} parent=1 // pred_fallthru
      _
    %v41 = vld [vmem:[#allocation2] sm:$0xff]
    %v42 = vld [vmem:[#allocation5] sm:$0xff]
    %v43 = vld [vmem:[#allocation5 + $0x8] sm:$0xff]
    %v44 = vld [vmem:[#allocation5 + $0x10] sm:$0xff]
    %v45 = vld [vmem:[#allocation5 + $0x18] sm:$0xff]
    %v46 = vld [vmem:[#allocation5 + $0x20] sm:$0xff]
    %v47 = vld [vmem:[#allocation5 + $0x28] sm:$0xff]
    %v48 = vld [vmem:[#allocation5 + $0x30] sm:$0xff]
    %v49 = vld [vmem:[#allocation5 + $0x38] sm:$0xff]
    %v50 = vld [vmem:[#allocation5 + $0x40] sm:$0xff]
    %v51 = vld [vmem:[#allocation5 + $0x48] sm:$0xff]
    %v52 = vld [vmem:[#allocation5 + $0x50] sm:$0xff]
    %v53 = vld [vmem:[#allocation5 + $0x58] sm:$0xff]
    %v54 = vld [vmem:[#allocation5 + $0x60] sm:$0xff]
    %v55 = vld [vmem:[#allocation5 + $0x68] sm:$0xff]
    %v56 = vld [vmem:[#allocation5 + $0x70] sm:$0xff]
    %v57 = vld [vmem:[#allocation5 + $0x78] sm:$0xff]
    %v58 = vld [vmem:[%s2] sm:$0x1]
    %v60 = vlaneseq
    %v61 = vshrl.u32 %v60, 7
    %v62 = vsub.s32 0, %v61
    %v63 = vrot.slane %v58, %v62
    %65 = vmatprep.subr.mxu0 0.0
    %66 = vmatpush1.msra.mxu0 %v42
    %67 = vmatprep.subr.mxu0 0.0
    %68 = vmatpush1.msra.mxu0 %v43
    %69 = vmatprep.subr.mxu0 0.0
    %70 = vmatpush1.msra.mxu0 %v44
    %71 = vmatprep.subr.mxu0 0.0
    %72 = vmatpush1.msra.mxu0 %v45
    %73 = vmatprep.subr.mxu0 0.0
    %74 = vmatpush1.msra.mxu0 %v46
    %75 = vmatprep.subr.mxu0 0.0
    %76 = vmatpush1.msra.mxu0 %v47
    %77 = vmatprep.subr.mxu0 0.0
    %78 = vmatpush1.msra.mxu0 %v48
    %79 = vmatprep.subr.mxu0 0.0
    %80 = vmatpush1.msra.mxu0 %v49
    %81 = vmatprep.subr.mxu0 0.0
    %82 = vmatpush1.msra.mxu0 %v50
    %83 = vmatprep.subr.mxu0 0.0
    %84 = vmatpush1.msra.mxu0 %v51
    %85 = vmatprep.subr.mxu0 0.0
    %86 = vmatpush1.msra.mxu0 %v52
    %87 = vmatprep.subr.mxu0 0.0
    %88 = vmatpush1.msra.mxu0 %v53
    %89 = vmatprep.subr.mxu0 0.0
    %90 = vmatpush1.msra.mxu0 %v54
    %91 = vmatprep.subr.mxu0 0.0
    %92 = vmatpush1.msra.mxu0 %v55
    %93 = vmatprep.subr.mxu0 0.0
    %94 = vmatpush1.msra.mxu0 %v56
    %95 = vmatprep.subr.mxu0 0.0
    %96 = vmatpush1.msra.mxu0 %v57
    %97 = vmatprep.subr.mxu0 0.0
    %98 = vmatpush1.msra.mxu0 0.0
    %99 = vmatprep.subr.mxu0 0.0
    %100 = vmatpush1.msra.mxu0 0.0
    %101 = vmatprep.subr.mxu0 0.0
    %102 = vmatpush1.msra.mxu0 0.0
    %103 = vmatprep.subr.mxu0 0.0
    %104 = vmatpush1.msra.mxu0 0.0
    %105 = vmatprep.subr.mxu0 0.0
    %106 = vmatpush1.msra.mxu0 0.0
    %107 = vmatprep.subr.mxu0 0.0
    %108 = vmatpush1.msra.mxu0 0.0
    %109 = vmatprep.subr.mxu0 0.0
    %110 = vmatpush1.msra.mxu0 0.0
    %111 = vmatprep.subr.mxu0 0.0
    %112 = vmatpush1.msra.mxu0 0.0
    %113 = vmatprep.subr.mxu0 0.0
    %114 = vmatpush1.msra.mxu0 0.0
    %115 = vmatprep.subr.mxu0 0.0
    %116 = vmatpush1.msra.mxu0 0.0
    %117 = vmatprep.subr.mxu0 0.0
    %118 = vmatpush1.msra.mxu0 0.0
    %119 = vmatprep.subr.mxu0 0.0
    %120 = vmatpush1.msra.mxu0 0.0
    %121 = vmatprep.subr.mxu0 0.0
    %122 = vmatpush1.msra.mxu0 0.0
    %123 = vmatprep.subr.mxu0 0.0
    %124 = vmatpush1.msra.mxu0 0.0
    %125 = vmatprep.subr.mxu0 0.0
    %126 = vmatpush1.msra.mxu0 0.0
    %127 = vmatprep.subr.mxu0 0.0
    %128 = vmatpush1.msra.mxu0 0.0
    %129 = vmatprep.mubr.f32.mxu0 0.0
    %130 = vmatmul.mubr.f32.gmra.mrb[0].mxu0 %v41
    %v131 = vpop.f32.mrb[0].mxu0
    %v132 = vadd.f32 %v63, %v131
    %v133 = vpop.f32.mrb[0].mxu0
    %134 = vdwg.mxu0
    %v135 = vmul.f32 %v132, %v132
    %136 = vadd.xlane.f32.xlu0 %v135
    %v137 = vpop.xlane.xlu0 %136
    %v138 = vmax.f32 %v137, 1e-24
    %v139 = vrsqrt.pop %v138
    %v140 = vmul.f32 %v132, %v139
    %141 = vst [vmem:[#allocation7] sm:$0xff] %v140
    // Predicated region
    $region22: #{tpu_custom_call.1} parent=1 // pred_check
      _
    $region23: #{tpu_custom_call.1} parent=1 // pred_check_branch
      %143 = sbr.rel (0) target = $region25
    $region24: #{tpu_custom_call.1} parent=1 // pred_region
      %s145 = ssub.s32 128, 128
      %146 = vsyncadd [#allocation4], %s145
      %s148 = sshll.u32 [#allocation7], 4
      %s149 = int_to_ptr.vmem [resolvable:$true] %s148
      %151 = dma.vmem_to_hbm [thread:$0]  %s149, 128, %s3, [#allocation4]
    $region25: #{tpu_custom_call.1} parent=1 // pred_fallthru
      _
    // Predicated region
    $region26: #{tpu_custom_call.1} parent=1 // pred_check
      _
    $region27: #{tpu_custom_call.1} parent=1 // pred_check_branch
      %153 = sbr.rel (0) target = $region29
    $region28: #{tpu_custom_call.1} parent=1 // pred_region
      %154 = dma.done [#allocation4], 128
    $region29: #{tpu_custom_call.1} parent=1 // pred_fallthru
      _
    %155 = vsyncpa [#allocation3], 1
    %156 = vsyncpa [#allocation6], 1
    %157 = vsyncpa [#allocation4], 1

</llo_original>
